<compile_context>
chip_gen: v7x
topology: tpu7x:2x2x1
jax: 0.10.0
libtpu: 0.0.40
codegen_flags: <defaults>
</compile_context>

<pallas_src>
import functools

import jax
import jax.numpy as jnp
from jax.experimental import pallas as pl
from jax.experimental.pallas import tpu as pltpu

LANE = 128             # lane width (last dim of a vreg)
SUBLANE = 8            # sublane width (second-to-last dim of a vreg)
MAX_BATCH_TILE = 2048  # rows per grid step (perf review: 256 -> 2048+)
MIN_SPLIT_BATCH = 1024 # above this, force >=2 tiles so both v7x TCs get work


def _round_up(n, m):
    return ((n + m - 1) // m) * m


def _cdiv(a, b):
    return -(-a // b)


def _use_bf16_dots():
    """bf16 MXU inputs on v6e/v7x (f32 matmul is emulated there).
    Keep f32 on v5e/older or anything we cannot identify."""
    try:
        kind = jax.devices()[0].device_kind.lower()
    except Exception:
        return False
    return ("v6" in kind) or ("v7" in kind) or ("tpu7" in kind)


# ---------------------------------------------------------------------------
# Fused Pallas kernel: (x [+ perturb]) -> Linear/act -> ... -> Linear -> out
# ---------------------------------------------------------------------------
def _fused_mlp_kernel(*refs, n_layers, acts, has_perturb, compute_dtype):
    # refs layout: x, [perturb], (w_0, b_0), ..., (w_{n-1}, b_{n-1}), out
    idx = 0
    h = refs[idx][...]
    idx += 1
    if has_perturb:
        h = h + refs[idx][...]                 # fused `x + perturb` (VPU)
        idx += 1
    for l in range(n_layers):
        w = refs[idx][...]                     # already compute_dtype (bf16 on v6e/v7x)
        b = refs[idx + 1][...]                 # f32 bias
        idx += 2
        # MXU matmul with f32 accumulation, bias add on VPU, tanh on EUP.
        h = jnp.dot(h.astype(compute_dtype), w,
                    preferred_element_type=jnp.float32) + b
        if acts[l]:
            h = jnp.tanh(h)
    out_ref = refs[idx]
    out_ref[...] = h.astype(out_ref.dtype)


def fused_mlp_forward(x, perturb, params, acts, tile_b, d_out, compute_dtype):
    """Single pallas_call for the whole MLP.

    x:        (Bp, Din)  f32, Bp a multiple of tile_b
    perturb:  (Bp, Din)  f32 or None
    params:   list of (w, b); hidden-layer outputs lane-padded to 128, last layer natural
    """
    Bp, Din = x.shape
    n_layers = len(params)
    has_perturb = perturb is not None
    grid = (Bp // tile_b,)

    in_specs = [pl.BlockSpec((tile_b, Din), lambda i: (i, 0))]
    args = [x]
    if has_perturb:
        in_specs.append(pl.BlockSpec((tile_b, Din), lambda i: (i, 0)))
        args.append(perturb)
    for (w, b) in params:
        # Weights/bias: full-array blocks, index_map -> (0,0) => VMEM-resident.
        in_specs.append(pl.BlockSpec(w.shape, lambda i: (0, 0)))
        in_specs.append(pl.BlockSpec(b.shape, lambda i: (0, 0)))
        args += [w, b]

    # Natural-width output (d_out == full last dim, so the block is legal);
    # removes the padded-output + wrapper-slice HBM passes.
    out_specs = pl.BlockSpec((tile_b, d_out), lambda i: (i, 0))

    kernel = functools.partial(
        _fused_mlp_kernel, n_layers=n_layers, acts=acts,
        has_perturb=has_perturb, compute_dtype=compute_dtype)

    # ---- advisory cost estimate for the XLA scheduler ----
    flops = 0
    transcendentals = 0
    for (w, _), a in zip(params, acts):
        flops += 2 * Bp * w.shape[0] * w.shape[1]
        if a:
            transcendentals += Bp * w.shape[1]
    nbytes = lambda a: a.size * a.dtype.itemsize
    bytes_accessed = (
        nbytes(x)
        + (nbytes(perturb) if has_perturb else 0)
        + sum(nbytes(w) + nbytes(b) for (w, b) in params)
        + Bp * d_out * 4)

    # ---- explicit VMEM budget (v7x: 64 MiB physical / 32 MiB default scoped;
    # v5e: 16 MiB default scoped). Double-buffered activation tiles + resident
    # weights (x2 buffering) + headroom for compiler temporaries of the widest
    # intermediate activation.
    max_width = max(w.shape[1] for (w, _) in params)
    tile_in_bytes = tile_b * Din * 4 * (2 if has_perturb else 1)
    tile_out_bytes = tile_b * d_out * 4
    weight_bytes = sum(nbytes(w) + nbytes(b) for (w, b) in params)
    interm_bytes = 4 * tile_b * max_width * 4
    vmem_bytes = 2 * tile_in_bytes + 2 * tile_out_bytes + 2 * weight_bytes + interm_bytes
    vmem_limit = int(min(max(2 * vmem_bytes, 16 << 20), 48 << 20))

    return pl.pallas_call(
        kernel,
        out_shape=jax.ShapeDtypeStruct((Bp, d_out), jnp.float32),
        grid=grid,
        in_specs=in_specs,
        out_specs=out_specs,
        compiler_params=pltpu.CompilerParams(
            dimension_semantics=("parallel",),
            vmem_limit_bytes=vmem_limit,
        ),
        cost_estimate=pl.CostEstimate(
            flops=int(flops),
            transcendentals=int(transcendentals),
            bytes_accessed=int(bytes_accessed),
        ),
    )(*args)


# ---------------------------------------------------------------------------
# MLP wrapper (mirrors the PyTorch module's forward)
# ---------------------------------------------------------------------------
class MLP:
    def __init__(self, layer_params, use_bf16=None):
        """layer_params: list of (w, b, apply_tanh); w: (d_in, d_out), b: (d_out,) or (1, d_out)."""
        self.acts = tuple(bool(a) for (_, _, a) in layer_params)
        self.d_in = int(layer_params[0][0].shape[0])
        self.d_out = int(layer_params[-1][0].shape[1])
        self.use_bf16 = _use_bf16_dots() if use_bf16 is None else bool(use_bf16)
        self.compute_dtype = jnp.bfloat16 if self.use_bf16 else jnp.float32

        # Hidden layers: zero-pad OUTPUT feature dim to a multiple of 128 once at
        # construction (exact: padded units are tanh(0)=0 and the next layer's
        # padded weight rows are 0). Last layer kept at natural d_out so the
        # kernel writes the final result directly (no wrapper feature slice).
        padded = []
        prev_in = self.d_in
        n = len(layer_params)
        for li, (w, b, _) in enumerate(layer_params):
            din, dout = int(w.shape[0]), int(w.shape[1])
            is_last = (li == n - 1)
            dout_p = dout if is_last else _round_up(dout, LANE)
            wp = jnp.zeros((prev_in, dout_p), jnp.float32).at[:din, :dout].set(
                jnp.asarray(w, jnp.float32))
            b2 = jnp.reshape(jnp.asarray(b, jnp.float32), (1, dout))
            bp = jnp.zeros((1, dout_p), jnp.float32).at[:, :dout].set(b2)
            padded.append((wp.astype(self.compute_dtype), bp))  # bias stays f32
            prev_in = dout_p
        self.params = padded

    def _choose_tile(self, B):
        # Balanced tiles: minimal ragged padding, tiles capped at MAX_BATCH_TILE,
        # and >=2 tiles for large batches so v7x's two TensorCores both get work.
        num_tiles = max(1, _cdiv(B, MAX_BATCH_TILE))
        if num_tiles == 1 and B >= MIN_SPLIT_BATCH:
            num_tiles = 2
        return _round_up(_cdiv(B, num_tiles), SUBLANE)

    def __call__(self, x, perturb=None):
        B, din = x.shape
        assert din == self.d_in, f"expected input dim {self.d_in}, got {din}"
        x = jnp.asarray(x, jnp.float32)
        if perturb is not None:
            perturb = jnp.asarray(perturb, jnp.float32)

        tile_b = self._choose_tile(B)
        Bp = _round_up(B, tile_b)
        if Bp != B:
            x = jnp.pad(x, ((0, Bp - B), (0, 0)))
            if perturb is not None:
                perturb = jnp.pad(perturb, ((0, Bp - B), (0, 0)))

        out = fused_mlp_forward(x, perturb, self.params, self.acts,
                                tile_b, self.d_out, self.compute_dtype)
        return out if Bp == B else out[:B]


def init_linear(key, d_in, d_out):
    """Deterministic init mimicking torch.nn.Linear's U(-1/sqrt(d_in), 1/sqrt(d_in))."""
    kw, kb = jax.random.split(key)
    bound = 1.0 / jnp.sqrt(jnp.float32(d_in))
    w = jax.random.uniform(kw, (d_in, d_out), jnp.float32, -bound, bound)
    b = jax.random.uniform(kb, (1, d_out), jnp.float32, -bound, bound)
    return w, b


# ---------------------------------------------------------------------------
if __name__ == "__main__":
    key = jax.random.PRNGKey(0)
    k_x, k_p, k1, k2, k3 = jax.random.split(key, 5)

    batch, d_in, d_hidden, d_out = 8, 32, 64, 16

    w1, b1 = init_linear(k1, d_in, d_hidden)
    w2, b2 = init_linear(k2, d_hidden, d_hidden)
    w3, b3 = init_linear(k3, d_hidden, d_out)

    mlp = MLP([(w1, b1, True), (w2, b2, True), (w3, b3, False)])
    # bf16 dots on v6e/v7x break 1e-5 parity; relax tolerance there.
    tol = 5e-2 if mlp.use_bf16 else 1e-5

    x = jax.random.normal(k_x, (batch, d_in), jnp.float32)
    perturb = 0.01 * jax.random.normal(k_p, (batch, d_in), jnp.float32)

    out = jax.block_until_ready(mlp(x, perturb=perturb))

    # Reference check in plain JAX f32 (same math as the PyTorch forward).
    h = jnp.tanh((x + perturb) @ w1 + b1)
    h = jnp.tanh(h @ w2 + b2)
    ref = h @ w3 + b3
    assert out.shape == (batch, d_out)
    assert jnp.allclose(out, ref, atol=tol, rtol=tol)

    # perturb=None path.
    out2 = jax.block_until_ready(mlp(x))
    h2 = jnp.tanh(jnp.tanh(x @ w1 + b1) @ w2 + b2)
    ref2 = h2 @ w3 + b3
    assert out2.shape == (batch, d_out)
    assert jnp.allclose(out2, ref2, atol=tol, rtol=tol)

    # Ragged (non-multiple-of-8) batch exercises the minimal pad/slice path.
    xb = jax.random.normal(k_x, (20, d_in), jnp.float32)
    outb = jax.block_until_ready(mlp(xb))
    hb = jnp.tanh(jnp.tanh(xb @ w1 + b1) @ w2 + b2)
    refb = hb @ w3 + b3
    assert outb.shape == (20, d_out)
    assert jnp.allclose(outb, refb, atol=tol, rtol=tol)

    print("KERNEL_OK")
</pallas_src>

<mosaic_0001>
module attributes {stable_mosaic.version = 11 : i64} {
  func.func @_fused_mlp_kernel(%arg0: i32, %arg1: memref<8x32xf32, #tpu.memory_space<vmem>>, %arg2: memref<8x32xf32, #tpu.memory_space<vmem>>, %arg3: memref<32x128xf32, #tpu.memory_space<vmem>>, %arg4: memref<1x128xf32, #tpu.memory_space<vmem>>, %arg5: memref<128x128xf32, #tpu.memory_space<vmem>>, %arg6: memref<1x128xf32, #tpu.memory_space<vmem>>, %arg7: memref<128x16xf32, #tpu.memory_space<vmem>>, %arg8: memref<1x16xf32, #tpu.memory_space<vmem>>, %arg9: memref<8x16xf32, #tpu.memory_space<vmem>>) attributes {dimension_semantics = [#tpu.dimension_semantics<parallel>], iteration_bounds = array<i64: 1>, scalar_prefetch = 0 : i64, scratch_operands = 0 : i64, tpu.core_type = #tpu.core_type<tc>, window_params = [{transform_indices = @transform_0, window_bounds = array<i64: 8, 32>}, {transform_indices = @transform_1, window_bounds = array<i64: 8, 32>}, {pipeline_mode = #tpu.pipeline_mode<synchronous>, transform_indices = @transform_2, window_bounds = array<i64: 32, 128>}, {pipeline_mode = #tpu.pipeline_mode<synchronous>, transform_indices = @transform_3, window_bounds = array<i64: 1, 128>}, {pipeline_mode = #tpu.pipeline_mode<synchronous>, transform_indices = @transform_4, window_bounds = array<i64: 128, 128>}, {pipeline_mode = #tpu.pipeline_mode<synchronous>, transform_indices = @transform_5, window_bounds = array<i64: 1, 128>}, {pipeline_mode = #tpu.pipeline_mode<synchronous>, transform_indices = @transform_6, window_bounds = array<i64: 128, 16>}, {pipeline_mode = #tpu.pipeline_mode<synchronous>, transform_indices = @transform_7, window_bounds = array<i64: 1, 16>}, {transform_indices = @transform_8, window_bounds = array<i64: 8, 16>}]} {
    %c0 = arith.constant 0 : index
    %c0_0 = arith.constant 0 : index
    %0 = vector.load %arg1[%c0, %c0_0] : memref<8x32xf32, #tpu.memory_space<vmem>>, vector<8x32xf32>
    %c0_1 = arith.constant 0 : index
    %c0_2 = arith.constant 0 : index
    %1 = vector.load %arg2[%c0_1, %c0_2] : memref<8x32xf32, #tpu.memory_space<vmem>>, vector<8x32xf32>
    %2 = arith.addf %0, %1 : vector<8x32xf32>
    %c0_3 = arith.constant 0 : index
    %c0_4 = arith.constant 0 : index
    %3 = vector.load %arg3[%c0_3, %c0_4] : memref<32x128xf32, #tpu.memory_space<vmem>>, vector<32x128xf32>
    %c0_5 = arith.constant 0 : index
    %c0_6 = arith.constant 0 : index
    %4 = vector.load %arg4[%c0_5, %c0_6] : memref<1x128xf32, #tpu.memory_space<vmem>>, vector<1x128xf32>
    %cst = arith.constant dense<0.000000e+00> : vector<8x128xf32>
    %5 = tpu.matmul %2, %3, %cst {dimension_numbers = #tpu.dot_dimension_numbers<[1], [0], [0], [1], [0, 0, 1, 1], [], []>} : vector<8x32xf32>, vector<32x128xf32>, vector<8x128xf32> -> vector<8x128xf32>
    %6 = vector.broadcast %4 : vector<1x128xf32> to vector<8x128xf32>
    %7 = arith.addf %5, %6 : vector<8x128xf32>
    %8 = math.tanh %7 : vector<8x128xf32>
    %c0_7 = arith.constant 0 : index
    %c0_8 = arith.constant 0 : index
    %9 = vector.load %arg5[%c0_7, %c0_8] : memref<128x128xf32, #tpu.memory_space<vmem>>, vector<128x128xf32>
    %c0_9 = arith.constant 0 : index
    %c0_10 = arith.constant 0 : index
    %10 = vector.load %arg6[%c0_9, %c0_10] : memref<1x128xf32, #tpu.memory_space<vmem>>, vector<1x128xf32>
    %cst_11 = arith.constant dense<0.000000e+00> : vector<8x128xf32>
    %11 = tpu.matmul %8, %9, %cst_11 {dimension_numbers = #tpu.dot_dimension_numbers<[1], [0], [0], [1], [0, 0, 1, 1], [], []>} : vector<8x128xf32>, vector<128x128xf32>, vector<8x128xf32> -> vector<8x128xf32>
    %12 = vector.broadcast %10 : vector<1x128xf32> to vector<8x128xf32>
    %13 = arith.addf %11, %12 : vector<8x128xf32>
    %14 = math.tanh %13 : vector<8x128xf32>
    %c0_12 = arith.constant 0 : index
    %c0_13 = arith.constant 0 : index
    %15 = vector.load %arg7[%c0_12, %c0_13] : memref<128x16xf32, #tpu.memory_space<vmem>>, vector<128x16xf32>
    %c0_14 = arith.constant 0 : index
    %c0_15 = arith.constant 0 : index
    %16 = vector.load %arg8[%c0_14, %c0_15] : memref<1x16xf32, #tpu.memory_space<vmem>>, vector<1x16xf32>
    %cst_16 = arith.constant dense<0.000000e+00> : vector<8x16xf32>
    %17 = tpu.matmul %14, %15, %cst_16 {dimension_numbers = #tpu.dot_dimension_numbers<[1], [0], [0], [1], [0, 0, 1, 1], [], []>} : vector<8x128xf32>, vector<128x16xf32>, vector<8x16xf32> -> vector<8x16xf32>
    %18 = vector.broadcast %16 : vector<1x16xf32> to vector<8x16xf32>
    %19 = arith.addf %17, %18 : vector<8x16xf32>
    %c0_17 = arith.constant 0 : index
    %c0_18 = arith.constant 0 : index
    %20 = vector.load %arg9[%c0_17, %c0_18] : memref<8x16xf32, #tpu.memory_space<vmem>>, vector<8x16xf32>
    tpu.vector_store %arg9[%c0_17, %c0_18], %19 {strides = array<i32>} : memref<8x16xf32, #tpu.memory_space<vmem>>, vector<8x16xf32>,
    return
  }
  func.func @transform_0(%arg0: i32) -> (i32, i32) {
    %c0_i32 = arith.constant 0 : i32
    %c0_i32_0 = arith.constant 0 : i32
    return %arg0, %c0_i32 : i32, i32
  }
  func.func @transform_1(%arg0: i32) -> (i32, i32) {
    %c0_i32 = arith.constant 0 : i32
    %c0_i32_0 = arith.constant 0 : i32
    return %arg0, %c0_i32 : i32, i32
  }
  func.func @transform_2(%arg0: i32) -> (i32, i32) {
    %c0_i32 = arith.constant 0 : i32
    %c0_i32_0 = arith.constant 0 : i32
    %c0_i32_1 = arith.constant 0 : i32
    return %c0_i32, %c0_i32_0 : i32, i32
  }
  func.func @transform_3(%arg0: i32) -> (i32, i32) {
    %c0_i32 = arith.constant 0 : i32
    %c0_i32_0 = arith.constant 0 : i32
    %c0_i32_1 = arith.constant 0 : i32
    return %c0_i32, %c0_i32_0 : i32, i32
  }
  func.func @transform_4(%arg0: i32) -> (i32, i32) {
    %c0_i32 = arith.constant 0 : i32
    %c0_i32_0 = arith.constant 0 : i32
    %c0_i32_1 = arith.constant 0 : i32
    return %c0_i32, %c0_i32_0 : i32, i32
  }
  func.func @transform_5(%arg0: i32) -> (i32, i32) {
    %c0_i32 = arith.constant 0 : i32
    %c0_i32_0 = arith.constant 0 : i32
    %c0_i32_1 = arith.constant 0 : i32
    return %c0_i32, %c0_i32_0 : i32, i32
  }
  func.func @transform_6(%arg0: i32) -> (i32, i32) {
    %c0_i32 = arith.constant 0 : i32
    %c0_i32_0 = arith.constant 0 : i32
    %c0_i32_1 = arith.constant 0 : i32
    return %c0_i32, %c0_i32_0 : i32, i32
  }
  func.func @transform_7(%arg0: i32) -> (i32, i32) {
    %c0_i32 = arith.constant 0 : i32
    %c0_i32_0 = arith.constant 0 : i32
    %c0_i32_1 = arith.constant 0 : i32
    return %c0_i32, %c0_i32_0 : i32, i32
  }
  func.func @transform_8(%arg0: i32) -> (i32, i32) {
    %c0_i32 = arith.constant 0 : i32
    %c0_i32_0 = arith.constant 0 : i32
    return %arg0, %c0_i32 : i32, i32
  }
}

</mosaic_0001>

<llo_original>
// kernel: tpu_custom_call.1
$region0: #{tpu_custom_call.1}
  #allocation0 [shape = 'u32[]', space=smem, size = 0x4, offset = 0x4, fixed_abs, tag = 'smem constant byte address 0x4 - core index']
  #allocation1 [shape = 'u32[144,128]{1,0:T(1,128)}', space=vmem, size = 0x12000, scoped, tag = 'internal scratch']
  %s0 = inlined_call_operand.vmem [shape: f32[8,32], index: 0, kind: input, shape index: {}]
  %s1 = inlined_call_operand.vmem [shape: f32[8,32], index: 1, kind: input, shape index: {}]
  %s2 = inlined_call_operand.hbm [shape: f32[32,128], index: 2, kind: input, shape index: {}]
  %s3 = inlined_call_operand.vmem [shape: f32[1,128], index: 3, kind: input, shape index: {}]
  %s4 = inlined_call_operand.vmem [shape: f32[128,128], index: 4, kind: input, shape index: {}]
  %s5 = inlined_call_operand.vmem [shape: f32[1,128], index: 5, kind: input, shape index: {}]
  %s6 = inlined_call_operand.vmem [shape: f32[128,16], index: 6, kind: input, shape index: {}]
  %s7 = inlined_call_operand.vmem [shape: f32[1,16], index: 7, kind: input, shape index: {}]
  %s8 = inlined_call_operand.hbm [shape: f32[8,16], index: 8, kind: output, shape index: {}]
  %s9 = sld [smem:[#allocation0]]
  $region46: #{tpu_custom_call.1} parent=0
    _
  %s11 = ssub.s32 1, %s9
  %s12 = scalar_select 0, %s11, %s9
  $region1: #{tpu_custom_call.1} parent=0
    #allocation2 [shape = 'u8[16384]{0}', space=vmem, size = 0x4000, scoped, tag = 'input window, operand 2, single buffered']
    #allocation3 [shape = 's32[1]{0}', space=sflag, size = 0x4, scoped, tag = 'scoped memory for tpu_custom_call.1']
    #allocation4 [shape = 's32[1]{0}', space=sflag, size = 0x4, scoped, tag = 'scoped memory for tpu_custom_call.1']
    #allocation5 [shape = 'u8[4096]{0}', space=vmem, size = 0x1000, scoped, tag = 'output window, operand 0, single buffered']
    %13 = vsyncpa [#allocation3], 0
    %14 = vsyncpa [#allocation4], 0
    // Predicated region
    $region2: #{tpu_custom_call.1} parent=1 // pred_check
      _
    $region3: #{tpu_custom_call.1} parent=1 // pred_check_branch
      %16 = sbr.rel (0) target = $region5
    $region4: #{tpu_custom_call.1} parent=1 // pred_region
      _
    $region5: #{tpu_custom_call.1} parent=1 // pred_fallthru
      _
    // Predicated region
    $region6: #{tpu_custom_call.1} parent=1 // pred_check
      _
    $region7: #{tpu_custom_call.1} parent=1 // pred_check_branch
      %18 = sbr.rel (0) target = $region9
    $region8: #{tpu_custom_call.1} parent=1 // pred_region
      _
    $region9: #{tpu_custom_call.1} parent=1 // pred_fallthru
      _
    // Predicated region
    $region10: #{tpu_custom_call.1} parent=1 // pred_check
      _
    $region11: #{tpu_custom_call.1} parent=1 // pred_check_branch
      %20 = sbr.rel (0) target = $region13
    $region12: #{tpu_custom_call.1} parent=1 // pred_region
      %s22 = ssub.s32 512, 512
      %23 = vsyncadd [#allocation3], %s22
      %s24 = sshll.u32 [#allocation2], 4
      %s25 = int_to_ptr.vmem [resolvable:$true] %s24
      %30 = dma.hbm_to_vmem [thread:$0]  %s2, 512, %s25, [#allocation3], 128, 128, 8
    $region13: #{tpu_custom_call.1} parent=1 // pred_fallthru
      _
    // Predicated region
    $region14: #{tpu_custom_call.1} parent=1 // pred_check
      _
    $region15: #{tpu_custom_call.1} parent=1 // pred_check_branch
      %32 = sbr.rel (0) target = $region17
    $region16: #{tpu_custom_call.1} parent=1 // pred_region
      _
    $region17: #{tpu_custom_call.1} parent=1 // pred_fallthru
      _
    // Predicated region
    $region18: #{tpu_custom_call.1} parent=1 // pred_check
      _
    $region19: #{tpu_custom_call.1} parent=1 // pred_check_branch
      %34 = sbr.rel (0) target = $region21
    $region20: #{tpu_custom_call.1} parent=1 // pred_region
      _
    $region21: #{tpu_custom_call.1} parent=1 // pred_fallthru
      _
    // Predicated region
    $region22: #{tpu_custom_call.1} parent=1 // pred_check
      _
    $region23: #{tpu_custom_call.1} parent=1 // pred_check_branch
      %36 = sbr.rel (0) target = $region25
    $region24: #{tpu_custom_call.1} parent=1 // pred_region
      _
    $region25: #{tpu_custom_call.1} parent=1 // pred_fallthru
      _
    // Predicated region
    $region26: #{tpu_custom_call.1} parent=1 // pred_check
      _
    $region27: #{tpu_custom_call.1} parent=1 // pred_check_branch
      %38 = sbr.rel (0) target = $region29
    $region28: #{tpu_custom_call.1} parent=1 // pred_region
      _
    $region29: #{tpu_custom_call.1} parent=1 // pred_fallthru
      _
    // Predicated region
    $region30: #{tpu_custom_call.1} parent=1 // pred_check
      _
    $region31: #{tpu_custom_call.1} parent=1 // pred_check_branch
      %40 = sbr.rel (0) target = $region33
    $region32: #{tpu_custom_call.1} parent=1 // pred_region
      _
    $region33: #{tpu_custom_call.1} parent=1 // pred_fallthru
      _
    // Predicated region
    $region34: #{tpu_custom_call.1} parent=1 // pred_check
      _
    $region35: #{tpu_custom_call.1} parent=1 // pred_check_branch
      %42 = sbr.rel (0) target = $region37
    $region36: #{tpu_custom_call.1} parent=1 // pred_region
      %43 = dma.done [#allocation3], 512
    $region37: #{tpu_custom_call.1} parent=1 // pred_fallthru
      _
    %v44 = vld [vmem:[%s0] sm:$0xff]
    %v45 = vld [vmem:[%s1] sm:$0xff]
    %v46 = vadd.f32 %v44, %v45
    %v47 = vld [vmem:[#allocation2] sm:$0xff]
    %v48 = vld [vmem:[#allocation2 + $0x8] sm:$0xff]
    %v49 = vld [vmem:[#allocation2 + $0x10] sm:$0xff]
    %v50 = vld [vmem:[#allocation2 + $0x18] sm:$0xff]
    %v51 = vld [vmem:[%s3] sm:$0x1]
    %v53 = vlaneseq
    %v54 = vshrl.u32 %v53, 7
    %v55 = vsub.s32 0, %v54
    %v56 = vrot.slane %v51, %v55
    %vm58 = vcmask 261120
    %v60 = vsel %vm58, %v46, 0
    %62 = vmatprep.subr.mxu0 0.0
    %63 = vmatpush1.msra.mxu0 %v47
    %64 = vmatprep.subr.mxu0 0.0
    %65 = vmatpush1.msra.mxu0 %v48
    %66 = vmatprep.subr.mxu0 0.0
    %67 = vmatpush1.msra.mxu0 %v49
    %68 = vmatprep.subr.mxu0 0.0
    %69 = vmatpush1.msra.mxu0 %v50
    %70 = vmatprep.subr.mxu0 0.0
    %71 = vmatpush1.msra.mxu0 0.0
    %72 = vmatprep.subr.mxu0 0.0
    %73 = vmatpush1.msra.mxu0 0.0
    %74 = vmatprep.subr.mxu0 0.0
    %75 = vmatpush1.msra.mxu0 0.0
    %76 = vmatprep.subr.mxu0 0.0
    %77 = vmatpush1.msra.mxu0 0.0
    %78 = vmatprep.subr.mxu0 0.0
    %79 = vmatpush1.msra.mxu0 0.0
    %80 = vmatprep.subr.mxu0 0.0
    %81 = vmatpush1.msra.mxu0 0.0
    %82 = vmatprep.subr.mxu0 0.0
    %83 = vmatpush1.msra.mxu0 0.0
    %84 = vmatprep.subr.mxu0 0.0
    %85 = vmatpush1.msra.mxu0 0.0
    %86 = vmatprep.subr.mxu0 0.0
    %87 = vmatpush1.msra.mxu0 0.0
    %88 = vmatprep.subr.mxu0 0.0
    %89 = vmatpush1.msra.mxu0 0.0
    %90 = vmatprep.subr.mxu0 0.0
    %91 = vmatpush1.msra.mxu0 0.0
    %92 = vmatprep.subr.mxu0 0.0
    %93 = vmatpush1.msra.mxu0 0.0
    %94 = vmatprep.subr.mxu0 0.0
    %95 = vmatpush1.msra.mxu0 0.0
    %96 = vmatprep.subr.mxu0 0.0
    %97 = vmatpush1.msra.mxu0 0.0
    %98 = vmatprep.subr.mxu0 0.0
    %99 = vmatpush1.msra.mxu0 0.0
    %100 = vmatprep.subr.mxu0 0.0
    %101 = vmatpush1.msra.mxu0 0.0
    %102 = vmatprep.subr.mxu0 0.0
    %103 = vmatpush1.msra.mxu0 0.0
    %104 = vmatprep.subr.mxu0 0.0
    %105 = vmatpush1.msra.mxu0 0.0
    %106 = vmatprep.subr.mxu0 0.0
    %107 = vmatpush1.msra.mxu0 0.0
    %108 = vmatprep.subr.mxu0 0.0
    %109 = vmatpush1.msra.mxu0 0.0
    %110 = vmatprep.subr.mxu0 0.0
    %111 = vmatpush1.msra.mxu0 0.0
    %112 = vmatprep.subr.mxu0 0.0
    %113 = vmatpush1.msra.mxu0 0.0
    %114 = vmatprep.subr.mxu0 0.0
    %115 = vmatpush1.msra.mxu0 0.0
    %116 = vmatprep.subr.mxu0 0.0
    %117 = vmatpush1.msra.mxu0 0.0
    %118 = vmatprep.subr.mxu0 0.0
    %119 = vmatpush1.msra.mxu0 0.0
    %120 = vmatprep.subr.mxu0 0.0
    %121 = vmatpush1.msra.mxu0 0.0
    %122 = vmatprep.subr.mxu0 0.0
    %123 = vmatpush1.msra.mxu0 0.0
    %124 = vmatprep.subr.mxu0 0.0
    %125 = vmatpush1.msra.mxu0 0.0
    %126 = vmatprep.mubr.f32.mxu0 0.0
    %127 = vmatmul.mubr.f32.gmra.mrb[0].mxu0 %v60
    %v128 = vpop.f32.mrb[0].mxu0
    %v129 = vadd.f32 %v56, %v128
    %v130 = vpop.f32.mrb[0].mxu0
    %131 = vdwg.mxu0
    %v132 = vtanh.pop %v129
    %v133 = vld [vmem:[%s4] sm:$0xff]
    %v134 = vld [vmem:[%s4 + $0x8] sm:$0xff]
    %v135 = vld [vmem:[%s4 + $0x10] sm:$0xff]
    %v136 = vld [vmem:[%s4 + $0x18] sm:$0xff]
    %v137 = vld [vmem:[%s4 + $0x20] sm:$0xff]
    %v138 = vld [vmem:[%s4 + $0x28] sm:$0xff]
    %v139 = vld [vmem:[%s4 + $0x30] sm:$0xff]
    %v140 = vld [vmem:[%s4 + $0x38] sm:$0xff]
    %v141 = vld [vmem:[%s4 + $0x40] sm:$0xff]
    %v142 = vld [vmem:[%s4 + $0x48] sm:$0xff]
    %v143 = vld [vmem:[%s4 + $0x50] sm:$0xff]
    %v144 = vld [vmem:[%s4 + $0x58] sm:$0xff]
    %v145 = vld [vmem:[%s4 + $0x60] sm:$0xff]
    %v146 = vld [vmem:[%s4 + $0x68] sm:$0xff]
    %v147 = vld [vmem:[%s4 + $0x70] sm:$0xff]
    %v148 = vld [vmem:[%s4 + $0x78] sm:$0xff]
    %v149 = vld [vmem:[%s5] sm:$0x1]
    %v151 = vlaneseq
    %v152 = vshrl.u32 %v151, 7
    %v153 = vsub.s32 0, %v152
    %v154 = vrot.slane %v149, %v153
    %156 = vmatprep.subr.mxu0 0.0
    %157 = vmatpush1.msra.mxu0 %v133
    %158 = vmatprep.subr.mxu0 0.0
    %159 = vmatpush1.msra.mxu0 %v134
    %160 = vmatprep.subr.mxu0 0.0
    %161 = vmatpush1.msra.mxu0 %v135
    %162 = vmatprep.subr.mxu0 0.0
    %163 = vmatpush1.msra.mxu0 %v136
    %164 = vmatprep.subr.mxu0 0.0
    %165 = vmatpush1.msra.mxu0 %v137
    %166 = vmatprep.subr.mxu0 0.0
    %167 = vmatpush1.msra.mxu0 %v138
    %168 = vmatprep.subr.mxu0 0.0
    %169 = vmatpush1.msra.mxu0 %v139
    %170 = vmatprep.subr.mxu0 0.0
    %171 = vmatpush1.msra.mxu0 %v140
    %172 = vmatprep.subr.mxu0 0.0
    %173 = vmatpush1.msra.mxu0 %v141
    %174 = vmatprep.subr.mxu0 0.0
    %175 = vmatpush1.msra.mxu0 %v142
    %176 = vmatprep.subr.mxu0 0.0
    %177 = vmatpush1.msra.mxu0 %v143
    %178 = vmatprep.subr.mxu0 0.0
    %179 = vmatpush1.msra.mxu0 %v144
    %180 = vmatprep.subr.mxu0 0.0
    %181 = vmatpush1.msra.mxu0 %v145
    %182 = vmatprep.subr.mxu0 0.0
    %183 = vmatpush1.msra.mxu0 %v146
    %184 = vmatprep.subr.mxu0 0.0
    %185 = vmatpush1.msra.mxu0 %v147
    %186 = vmatprep.subr.mxu0 0.0
    %187 = vmatpush1.msra.mxu0 %v148
    %188 = vmatprep.subr.mxu0 0.0
    %189 = vmatpush1.msra.mxu0 0.0
    %190 = vmatprep.subr.mxu0 0.0
    %191 = vmatpush1.msra.mxu0 0.0
    %192 = vmatprep.subr.mxu0 0.0
    %193 = vmatpush1.msra.mxu0 0.0
    %194 = vmatprep.subr.mxu0 0.0
    %195 = vmatpush1.msra.mxu0 0.0
    %196 = vmatprep.subr.mxu0 0.0
    %197 = vmatpush1.msra.mxu0 0.0
    %198 = vmatprep.subr.mxu0 0.0
    %199 = vmatpush1.msra.mxu0 0.0
    %200 = vmatprep.subr.mxu0 0.0
    %201 = vmatpush1.msra.mxu0 0.0
    %202 = vmatprep.subr.mxu0 0.0
    %203 = vmatpush1.msra.mxu0 0.0
    %204 = vmatprep.subr.mxu0 0.0
    %205 = vmatpush1.msra.mxu0 0.0
    %206 = vmatprep.subr.mxu0 0.0
    %207 = vmatpush1.msra.mxu0 0.0
    %208 = vmatprep.subr.mxu0 0.0
    %209 = vmatpush1.msra.mxu0 0.0
    %210 = vmatprep.subr.mxu0 0.0
    %211 = vmatpush1.msra.mxu0 0.0
    %212 = vmatprep.subr.mxu0 0.0
    %213 = vmatpush1.msra.mxu0 0.0
    %214 = vmatprep.subr.mxu0 0.0
    %215 = vmatpush1.msra.mxu0 0.0
    %216 = vmatprep.subr.mxu0 0.0
    %217 = vmatpush1.msra.mxu0 0.0
    %218 = vmatprep.subr.mxu0 0.0
    %219 = vmatpush1.msra.mxu0 0.0
    %220 = vmatprep.mubr.f32.mxu0 0.0
    %221 = vmatmul.mubr.f32.gmra.mrb[0].mxu0 %v132
    %v222 = vpop.f32.mrb[0].mxu0
    %v223 = vadd.f32 %v154, %v222
    %v224 = vpop.f32.mrb[0].mxu0
    %225 = vdwg.mxu0
    %v226 = vtanh.pop %v223
    %v227 = vld [vmem:[%s6] sm:$0xff]
    %v228 = vld [vmem:[%s6 + $0x8] sm:$0xff]
    %v229 = vld [vmem:[%s6 + $0x10] sm:$0xff]
    %v230 = vld [vmem:[%s6 + $0x18] sm:$0xff]
    %v231 = vld [vmem:[%s6 + $0x20] sm:$0xff]
    %v232 = vld [vmem:[%s6 + $0x28] sm:$0xff]
    %v233 = vld [vmem:[%s6 + $0x30] sm:$0xff]
    %v234 = vld [vmem:[%s6 + $0x38] sm:$0xff]
    %v235 = vld [vmem:[%s6 + $0x40] sm:$0xff]
    %v236 = vld [vmem:[%s6 + $0x48] sm:$0xff]
    %v237 = vld [vmem:[%s6 + $0x50] sm:$0xff]
    %v238 = vld [vmem:[%s6 + $0x58] sm:$0xff]
    %v239 = vld [vmem:[%s6 + $0x60] sm:$0xff]
    %v240 = vld [vmem:[%s6 + $0x68] sm:$0xff]
    %v241 = vld [vmem:[%s6 + $0x70] sm:$0xff]
    %v242 = vld [vmem:[%s6 + $0x78] sm:$0xff]
    %v243 = vld [vmem:[%s7] sm:$0x1]
    %v245 = vlaneseq
    %v246 = vshrl.u32 %v245, 7
    %v247 = vsub.s32 0, %v246
    %v248 = vrot.slane %v243, %v247
    %250 = vmatprep.subr.mxu0 0.0
    %251 = vmatpush1.msra.mxu0 %v227
    %252 = vmatprep.subr.mxu0 0.0
    %253 = vmatpush1.msra.mxu0 %v228
    %254 = vmatprep.subr.mxu0 0.0
    %255 = vmatpush1.msra.mxu0 %v229
    %256 = vmatprep.subr.mxu0 0.0
    %257 = vmatpush1.msra.mxu0 %v230
    %258 = vmatprep.subr.mxu0 0.0
    %259 = vmatpush1.msra.mxu0 %v231
    %260 = vmatprep.subr.mxu0 0.0
    %261 = vmatpush1.msra.mxu0 %v232
    %262 = vmatprep.subr.mxu0 0.0
    %263 = vmatpush1.msra.mxu0 %v233
    %264 = vmatprep.subr.mxu0 0.0
    %265 = vmatpush1.msra.mxu0 %v234
    %266 = vmatprep.subr.mxu0 0.0
    %267 = vmatpush1.msra.mxu0 %v235
    %268 = vmatprep.subr.mxu0 0.0
    %269 = vmatpush1.msra.mxu0 %v236
    %270 = vmatprep.subr.mxu0 0.0
    %271 = vmatpush1.msra.mxu0 %v237
    %272 = vmatprep.subr.mxu0 0.0
    %273 = vmatpush1.msra.mxu0 %v238
    %274 = vmatprep.subr.mxu0 0.0
    %275 = vmatpush1.msra.mxu0 %v239
    %276 = vmatprep.subr.mxu0 0.0
    %277 = vmatpush1.msra.mxu0 %v240
    %278 = vmatprep.subr.mxu0 0.0
    %279 = vmatpush1.msra.mxu0 %v241
    %280 = vmatprep.subr.mxu0 0.0
    %281 = vmatpush1.msra.mxu0 %v242
    %282 = vmatprep.subr.mxu0 0.0
    %283 = vmatpush1.msra.mxu0 0.0
    %284 = vmatprep.subr.mxu0 0.0
    %285 = vmatpush1.msra.mxu0 0.0
    %286 = vmatprep.subr.mxu0 0.0
    %287 = vmatpush1.msra.mxu0 0.0
    %288 = vmatprep.subr.mxu0 0.0
    %289 = vmatpush1.msra.mxu0 0.0
    %290 = vmatprep.subr.mxu0 0.0
    %291 = vmatpush1.msra.mxu0 0.0
    %292 = vmatprep.subr.mxu0 0.0
    %293 = vmatpush1.msra.mxu0 0.0
    %294 = vmatprep.subr.mxu0 0.0
    %295 = vmatpush1.msra.mxu0 0.0
    %296 = vmatprep.subr.mxu0 0.0
    %297 = vmatpush1.msra.mxu0 0.0
    %298 = vmatprep.subr.mxu0 0.0
    %299 = vmatpush1.msra.mxu0 0.0
    %300 = vmatprep.subr.mxu0 0.0
    %301 = vmatpush1.msra.mxu0 0.0
    %302 = vmatprep.subr.mxu0 0.0
    %303 = vmatpush1.msra.mxu0 0.0
    %304 = vmatprep.subr.mxu0 0.0
    %305 = vmatpush1.msra.mxu0 0.0
    %306 = vmatprep.subr.mxu0 0.0
    %307 = vmatpush1.msra.mxu0 0.0
    %308 = vmatprep.subr.mxu0 0.0
    %309 = vmatpush1.msra.mxu0 0.0
    %310 = vmatprep.subr.mxu0 0.0
    %311 = vmatpush1.msra.mxu0 0.0
    %312 = vmatprep.subr.mxu0 0.0
    %313 = vmatpush1.msra.mxu0 0.0
    %314 = vmatprep.mubr.f32.mxu0 0.0
    %315 = vmatmul.mubr.f32.gmra.mrb[0].mxu0 %v226
    %v316 = vpop.f32.mrb[0].mxu0
    %v317 = vadd.f32 %v248, %v316
    %v318 = vpop.f32.mrb[0].mxu0
    %319 = vdwg.mxu0
    %vm320 = vcmask 130048
    %321 = vst.msk [vmem:[#allocation5] sm:$0xff] %vm320, %v317
    // Predicated region
    $region38: #{tpu_custom_call.1} parent=1 // pred_check
      _
    $region39: #{tpu_custom_call.1} parent=1 // pred_check_branch
      %323 = sbr.rel (0) target = $region41
    $region40: #{tpu_custom_call.1} parent=1 // pred_region
      %s325 = ssub.s32 128, 128
      %326 = vsyncadd [#allocation4], %s325
      %s328 = sshll.u32 [#allocation5], 4
      %s329 = int_to_ptr.vmem [resolvable:$true] %s328
      %331 = dma.vmem_to_hbm [thread:$0]  %s329, 128, %s8, [#allocation4]
    $region41: #{tpu_custom_call.1} parent=1 // pred_fallthru
      _
    // Predicated region
    $region42: #{tpu_custom_call.1} parent=1 // pred_check
      _
    $region43: #{tpu_custom_call.1} parent=1 // pred_check_branch
      %333 = sbr.rel (0) target = $region45
    $region44: #{tpu_custom_call.1} parent=1 // pred_region
      %334 = dma.done [#allocation4], 128
    $region45: #{tpu_custom_call.1} parent=1 // pred_fallthru
      _
    %335 = vsyncpa [#allocation3], 1
    %336 = vsyncpa [#allocation4], 1

</llo_original>
